<compile_context>
chip_gen: v7x
topology: tpu7x:2x2x1
jax: 0.10.0
libtpu: 0.0.40
codegen_flags: <defaults>
</compile_context>

<pallas_src>
import jax
import jax.numpy as jnp
import numpy as np
from jax.experimental import pallas as pl
from jax.experimental.pallas import tpu as pltpu


def cca_kernel(x_ref, params_ref, o_ref):
    """CCALayer forward for one block of batch rows.

    x_ref / o_ref block: (Nb, C, H*W)   -- lane-dense spatial layout
    params_ref:          (Cr + C + 2, C) packed f32:
        rows [0, Cr)        -> w1  (Cr, C)
        rows [Cr, Cr+C)     -> w2  (C, Cr)   (cols [0, Cr))
        row  Cr+C           -> b1  (Cr,)     (cols [0, Cr))
        row  Cr+C+1         -> b2  (C,)
    """
    x = x_ref[...]                                        # (Nb, C, HW) native dtype
    nb, c, hw = x.shape
    p = params_ref[...]                                   # (Cr+C+2, C) f32
    cr = p.shape[0] - c - 2

    w1 = p[0:cr, :]                                       # (Cr, C)
    w2 = p[cr:cr + c, 0:cr]                               # (C, Cr)
    b1 = p[cr + c, 0:cr]                                  # (Cr,)
    b2 = p[cr + c + 1, :]                                 # (C,)

    # Per-channel statistics, accumulated in f32. Two-pass variance on the
    # VMEM-resident block (matches the PyTorch reference, no cancellation).
    # TODO(synk): if MLIR shows the f32 upcast of a bf16 block materializing a
    # full VMEM temp, chunk ssum/ssq over pl.ds slices of x_ref instead.
    xf = x.astype(jnp.float32)
    inv_hw = jnp.float32(1.0 / hw)
    mean = jnp.sum(xf, axis=-1) * inv_hw                  # (Nb, C) lane-reduce
    centered = xf - mean[:, :, None]
    var = jnp.sum(centered * centered, axis=-1) * inv_hw  # (Nb, C)
    y = jnp.sqrt(var) + mean                              # std + mean  (Nb, C)

    # conv_du (1x1 conv -> ReLU -> 1x1 conv -> sigmoid) on the VPU; both
    # contractions reduce over the lane (last) axis. Far too small for MXU.
    z = jnp.sum(y[:, None, :] * w1[None, :, :], axis=-1) + b1[None, :]   # (Nb, Cr)
    z = jnp.maximum(z, 0.0)
    s = jnp.sum(z[:, None, :] * w2[None, :, :], axis=-1) + b2[None, :]   # (Nb, C)
    s = jax.nn.sigmoid(s)

    # Apply in f32, cast only at the store (v5e-friendly, more accurate).
    o_ref[...] = (xf * s[:, :, None]).astype(o_ref.dtype)


def cca_ref(x, w1, b1, w2, b2):
    """Pure-JAX reference matching the PyTorch forward."""
    mean = jnp.mean(x, axis=(2, 3), keepdims=True)
    var = jnp.mean((x - mean) ** 2, axis=(2, 3), keepdims=True)
    y = jnp.sqrt(var) + mean                              # (N, C, 1, 1)
    y2 = y[:, :, 0, 0]                                    # (N, C)
    z = jnp.maximum(y2 @ w1.T + b1, 0.0)                  # (N, C//r)
    s = jax.nn.sigmoid(z @ w2.T + b2)                     # (N, C)
    return x * s[:, :, None, None]


def _vmem_capacity_bytes():
    try:
        return int(pltpu.get_tpu_info().vmem_capacity_bytes)
    except Exception:
        return 128 << 20       # conservative fallback (v5e/v6e size)


def _pick_block_n(n, row_bytes, vmem_cap):
    """Largest divisor of n whose block fits the per-generation VMEM budget,
    keeping >= 2 grid steps whenever n >= 2 (so v7x uses both TensorCores)."""
    max_block_bytes = max(vmem_cap // 6, 1 << 20)
    min_grid = 2 if n >= 2 else 1
    best = 1
    for d in range(1, n + 1):
        if n % d:
            continue
        if (n // d) < min_grid:
            continue
        if d * row_bytes <= max_block_bytes:
            best = max(best, d)
    return best


def cca_layer(x, w1, b1, w2, b2, *, block_n=None, use_pallas=None):
    """x: (N, C, H, W); w1: (C//r, C); b1: (C//r,); w2: (C, C//r); b2: (C,)."""
    N, C, H, W = x.shape
    HW = H * W
    Cr = w1.shape[0]
    itemsize = jnp.dtype(x.dtype).itemsize

    # Degenerate workloads: XLA's fused elementwise+reduce beats the fixed
    # pallas_call launch / pipeline-prime overhead.
    total_bytes = N * C * HW * itemsize
    if use_pallas is None:
        use_pallas = total_bytes >= (1 << 20)
    if not use_pallas:
        return cca_ref(x, w1, b1, w2, b2)

    vmem_cap = _vmem_capacity_bytes()
    row_bytes = C * HW * itemsize
    if block_n is None:
        block_n = _pick_block_n(N, row_bytes, vmem_cap)
    assert N % block_n == 0, "block_n must divide N"

    # Lane-dense layout: spatial dims collapsed onto the lane axis (free reshape).
    x3 = x.reshape(N, C, HW)

    # Pack the tiny conv_du parameters into a single f32 operand.
    P = Cr + C + 2
    params = jnp.zeros((P, C), jnp.float32)
    params = params.at[0:Cr, :].set(jnp.asarray(w1, jnp.float32))
    params = params.at[Cr:Cr + C, 0:Cr].set(jnp.asarray(w2, jnp.float32))
    params = params.at[Cr + C, 0:Cr].set(jnp.asarray(b1, jnp.float32))
    params = params.at[Cr + C + 1, :].set(jnp.asarray(b2, jnp.float32))

    # Accurate VMEM request: double-buffered input + output block, one small
    # params block (x2 buffers), plus a little compiler headroom.
    blk_bytes = block_n * row_bytes
    param_bytes = P * C * 4
    vmem_limit = int(min(4 * blk_bytes + 2 * param_bytes + (8 << 20), vmem_cap))

    out3 = pl.pallas_call(
        cca_kernel,
        out_shape=jax.ShapeDtypeStruct((N, C, HW), x.dtype),
        grid=(N // block_n,),
        in_specs=[
            pl.BlockSpec((block_n, C, HW), lambda n: (n, 0, 0)),
            pl.BlockSpec((P, C), lambda n: (0, 0)),
        ],
        out_specs=pl.BlockSpec((block_n, C, HW), lambda n: (n, 0, 0)),
        compiler_params=pltpu.CompilerParams(
            dimension_semantics=("parallel",),
            vmem_limit_bytes=vmem_limit,
        ),
    )(x3, params)

    return out3.reshape(N, C, H, W)


if __name__ == "__main__":
    # Shapes consistent with the module: channel=16, reduction=8 -> Cr=2.
    N, C, H, W = 2, 16, 16, 16
    reduction = 8
    Cr = C // reduction

    key = jax.random.PRNGKey(0)
    kx, k1, k2, k3, k4, kx2 = jax.random.split(key, 6)

    x = jax.random.normal(kx, (N, C, H, W), dtype=jnp.float32)
    # Deterministic synthetic conv_du parameters (1x1 convs -> dense weights).
    w1 = 0.3 * jax.random.normal(k1, (Cr, C), dtype=jnp.float32)   # Conv2d(C, C//r, 1)
    b1 = 0.1 * jax.random.normal(k2, (Cr,), dtype=jnp.float32)
    w2 = 0.3 * jax.random.normal(k3, (C, Cr), dtype=jnp.float32)   # Conv2d(C//r, C, 1)
    b2 = 0.1 * jax.random.normal(k4, (C,), dtype=jnp.float32)

    # Force the Pallas path for the small test shape (auto-dispatch would use
    # the fused XLA fallback here).
    out = jax.block_until_ready(cca_layer(x, w1, b1, w2, b2, use_pallas=True))
    ref = jax.block_until_ready(cca_ref(x, w1, b1, w2, b2))
    np.testing.assert_allclose(np.asarray(out), np.asarray(ref),
                               rtol=1e-5, atol=1e-5)

    # Second case: exercises block_n > 1 with a 2-step parallel grid.
    N2, H2, W2 = 8, 32, 32
    x2 = jax.random.normal(kx2, (N2, C, H2, W2), dtype=jnp.float32)
    out2 = jax.block_until_ready(cca_layer(x2, w1, b1, w2, b2, use_pallas=True))
    ref2 = jax.block_until_ready(cca_ref(x2, w1, b1, w2, b2))
    np.testing.assert_allclose(np.asarray(out2), np.asarray(ref2),
                               rtol=1e-5, atol=1e-5)

    print("KERNEL_OK")
</pallas_src>

<mosaic_0001>
module attributes {stable_mosaic.version = 11 : i64} {
  func.func @cca_kernel(%arg0: i32, %arg1: memref<1x16x256xf32, #tpu.memory_space<vmem>>, %arg2: memref<20x16xf32, #tpu.memory_space<vmem>>, %arg3: memref<1x16x256xf32, #tpu.memory_space<vmem>>) attributes {dimension_semantics = [#tpu.dimension_semantics<parallel>], iteration_bounds = array<i64: 2>, scalar_prefetch = 0 : i64, scratch_operands = 0 : i64, tpu.core_type = #tpu.core_type<tc>, window_params = [{transform_indices = @transform_0, window_bounds = array<i64: 1, 16, 256>}, {pipeline_mode = #tpu.pipeline_mode<synchronous>, transform_indices = @transform_1, window_bounds = array<i64: 20, 16>}, {transform_indices = @transform_2, window_bounds = array<i64: 1, 16, 256>}]} {
    %c0 = arith.constant 0 : index
    %c0_0 = arith.constant 0 : index
    %c0_1 = arith.constant 0 : index
    %0 = vector.load %arg1[%c0, %c0_0, %c0_1] : memref<1x16x256xf32, #tpu.memory_space<vmem>>, vector<1x16x256xf32>
    %c0_2 = arith.constant 0 : index
    %c0_3 = arith.constant 0 : index
    %1 = vector.load %arg2[%c0_2, %c0_3] : memref<20x16xf32, #tpu.memory_space<vmem>>, vector<20x16xf32>
    %2 = vector.extract_strided_slice %1 {offsets = [0, 0], sizes = [2, 16], strides = [1, 1]} : vector<20x16xf32> to vector<2x16xf32>
    %3 = vector.extract_strided_slice %1 {offsets = [2, 0], sizes = [16, 2], strides = [1, 1]} : vector<20x16xf32> to vector<16x2xf32>
    %4 = vector.extract_strided_slice %1 {offsets = [18, 0], sizes = [1, 2], strides = [1, 1]} : vector<20x16xf32> to vector<1x2xf32>
    %5 = vector.shape_cast %4 : vector<1x2xf32> to vector<2xf32>
    %6 = vector.extract_strided_slice %1 {offsets = [19, 0], sizes = [1, 16], strides = [1, 1]} : vector<20x16xf32> to vector<1x16xf32>
    %7 = vector.shape_cast %6 : vector<1x16xf32> to vector<16xf32>
    %cst = arith.constant dense<0.000000e+00> : vector<1x16xf32>
    %8 = vector.multi_reduction <add>, %0, %cst [2] : vector<1x16x256xf32> to vector<1x16xf32>
    %cst_4 = arith.constant 3.906250e-03 : f32
    %9 = vector.broadcast %cst_4 : f32 to vector<1x16xf32>
    %10 = arith.mulf %8, %9 : vector<1x16xf32>
    %11 = vector.shape_cast %10 : vector<1x16xf32> to vector<1x16x1xf32>
    %12 = vector.broadcast %11 : vector<1x16x1xf32> to vector<1x16x256xf32>
    %13 = arith.subf %0, %12 : vector<1x16x256xf32>
    %14 = arith.mulf %13, %13 : vector<1x16x256xf32>
    %cst_5 = arith.constant dense<0.000000e+00> : vector<1x16xf32>
    %15 = vector.multi_reduction <add>, %14, %cst_5 [2] : vector<1x16x256xf32> to vector<1x16xf32>
    %cst_6 = arith.constant 3.906250e-03 : f32
    %16 = vector.broadcast %cst_6 : f32 to vector<1x16xf32>
    %17 = arith.mulf %15, %16 : vector<1x16xf32>
    %18 = math.sqrt %17 : vector<1x16xf32>
    %19 = arith.addf %18, %10 : vector<1x16xf32>
    %20 = vector.shape_cast %19 : vector<1x16xf32> to vector<1x1x16xf32>
    %21 = vector.shape_cast %2 : vector<2x16xf32> to vector<1x2x16xf32>
    %22 = vector.broadcast %20 : vector<1x1x16xf32> to vector<1x2x16xf32>
    %23 = arith.mulf %22, %21 : vector<1x2x16xf32>
    %cst_7 = arith.constant dense<0.000000e+00> : vector<1x2xf32>
    %24 = vector.multi_reduction <add>, %23, %cst_7 [2] : vector<1x2x16xf32> to vector<1x2xf32>
    %25 = vector.shape_cast %5 : vector<2xf32> to vector<1x2xf32>
    %26 = arith.addf %24, %25 : vector<1x2xf32>
    %cst_8 = arith.constant 0.000000e+00 : f32
    %27 = vector.broadcast %cst_8 : f32 to vector<1x2xf32>
    %28 = arith.maximumf %26, %27 : vector<1x2xf32>
    %29 = vector.shape_cast %28 : vector<1x2xf32> to vector<1x1x2xf32>
    %30 = vector.shape_cast %3 : vector<16x2xf32> to vector<1x16x2xf32>
    %31 = vector.broadcast %29 : vector<1x1x2xf32> to vector<1x16x2xf32>
    %32 = arith.mulf %31, %30 : vector<1x16x2xf32>
    %cst_9 = arith.constant dense<0.000000e+00> : vector<1x16xf32>
    %33 = vector.multi_reduction <add>, %32, %cst_9 [2] : vector<1x16x2xf32> to vector<1x16xf32>
    %34 = vector.shape_cast %7 : vector<16xf32> to vector<1x16xf32>
    %35 = arith.addf %33, %34 : vector<1x16xf32>
    %36 = arith.negf %35 : vector<1x16xf32>
    %37 = math.exp %36 : vector<1x16xf32>
    %cst_10 = arith.constant 1.000000e+00 : f32
    %38 = vector.broadcast %cst_10 : f32 to vector<1x16xf32>
    %39 = arith.addf %38, %37 : vector<1x16xf32>
    %40 = arith.divf %38, %39 : vector<1x16xf32>
    %41 = vector.shape_cast %40 : vector<1x16xf32> to vector<1x16x1xf32>
    %42 = vector.broadcast %41 : vector<1x16x1xf32> to vector<1x16x256xf32>
    %43 = arith.mulf %0, %42 : vector<1x16x256xf32>
    %c0_11 = arith.constant 0 : index
    %c0_12 = arith.constant 0 : index
    %c0_13 = arith.constant 0 : index
    %44 = vector.load %arg3[%c0_11, %c0_12, %c0_13] : memref<1x16x256xf32, #tpu.memory_space<vmem>>, vector<1x16x256xf32>
    tpu.vector_store %arg3[%c0_11, %c0_12, %c0_13], %43 {strides = array<i32>} : memref<1x16x256xf32, #tpu.memory_space<vmem>>, vector<1x16x256xf32>,
    return
  }
  func.func @transform_0(%arg0: i32) -> (i32, i32, i32) {
    %c0_i32 = arith.constant 0 : i32
    %c0_i32_0 = arith.constant 0 : i32
    %c0_i32_1 = arith.constant 0 : i32
    return %arg0, %c0_i32, %c0_i32_0 : i32, i32, i32
  }
  func.func @transform_1(%arg0: i32) -> (i32, i32) {
    %c0_i32 = arith.constant 0 : i32
    %c0_i32_0 = arith.constant 0 : i32
    %c0_i32_1 = arith.constant 0 : i32
    return %c0_i32, %c0_i32_0 : i32, i32
  }
  func.func @transform_2(%arg0: i32) -> (i32, i32, i32) {
    %c0_i32 = arith.constant 0 : i32
    %c0_i32_0 = arith.constant 0 : i32
    %c0_i32_1 = arith.constant 0 : i32
    return %arg0, %c0_i32, %c0_i32_0 : i32, i32, i32
  }
}

</mosaic_0001>

<llo_original>
// kernel: tpu_custom_call.1
$region0: #{tpu_custom_call.1}
  #allocation0 [shape = 'u32[]', space=smem, size = 0x4, offset = 0x4, fixed_abs, tag = 'smem constant byte address 0x4 - core index']
  #allocation1 [shape = 'u32[144,128]{1,0:T(1,128)}', space=vmem, size = 0x12000, scoped, tag = 'internal scratch']
  %s0 = inlined_call_operand.hbm [shape: f32[2,16,256], index: 0, kind: input, shape index: {}]
  %s1 = inlined_call_operand.vmem [shape: f32[20,16], index: 1, kind: input, shape index: {}]
  %s2 = inlined_call_operand.hbm [shape: f32[2,16,256], index: 2, kind: output, shape index: {}]
  %s3 = sld [smem:[#allocation0]]
  $region45: #{tpu_custom_call.1} parent=0
    _
  %s5 = ssub.s32 1, %s3
  %s6 = scalar_select 0, %s5, %s3
  $region1: #{tpu_custom_call.1} parent=0
    #allocation2 [shape = 'u8[32768]{0}', space=vmem, size = 0x8000, scoped, tag = 'input window, operand 0']
    #allocation3 [shape = 's32[2]{0}', space=sflag, size = 0x8, scoped, tag = 'scoped memory for tpu_custom_call.1']
    #allocation4 [shape = 's32[2]{0}', space=sflag, size = 0x8, scoped, tag = 'scoped memory for tpu_custom_call.1']
    #allocation5 [shape = 'u8[32768]{0}', space=vmem, size = 0x8000, scoped, tag = 'output window, operand 0']
    %7 = vsyncpa [#allocation3], 0
    %s8 = scalar_lea.sflag [#allocation3], 1
    %9 = vsyncpa %s8, 0
    %10 = vsyncpa [#allocation4], 0
    %s11 = scalar_lea.sflag [#allocation4], 1
    %12 = vsyncpa %s11, 0
    loop: start=0, step=1, limit=4
    $region2: #{tpu_custom_call.1} parent=1 // loop_pre_header
      _
    $region3: #{tpu_custom_call.1} parent=1 // loop_header
      %s14 = sphi 0, %s18
      %p15 = scmp.ge.s32.totalorder %s14, 4
      %s24 = sphi 0, %s26
      %s27 = sphi 0, %s24
      %s28 = sphi 0, %s27
      %s44 = sphi 0, %s28
      %s48 = sphi 0, %s48
      %s50 = sphi 0, %s48
      %s51 = sphi 0, %s50
      %s65 = sphi 0, %s51
      %s71 = sphi 0, %s73
      %s74 = sphi 0, %s71
      %s75 = sphi 0, %s74
      %s91 = sphi 0, %s75
    $region4: #{tpu_custom_call.1} parent=1 // loop_header_branch
      %17 = sbr.rel (%p15) target = $region8
    $region5: #{tpu_custom_call.1} parent=1 // loop_body
      %s19 = ssub.s32 %s14, 1
      %s20 = ssub.s32 %s14, 2
      %s21 = sadd.s32 %s14, 1
      %s22 = ssub.s32 %s14, %s21
      %p23 = scmp.eq.s32.totalorder %s22, 0
      %s25 = sadd.s32 %s24, 1
      %s26 = scalar_select %p23, %s24, %s25
      %p29 = pneg %p23
      %p30 = scmp.eq.s32.totalorder %s14, 1
      %p31 = por %p29, %p30
      %p32 = scmp.ne.s32.totalorder %s24, %s27
      %p33 = scmp.eq.s32.totalorder %s14, 0
      %p34 = por %p32, %p33
      %p35 = scmp.ne.s32.totalorder %s24, %s27
      %p36 = scmp.eq.s32.totalorder %s19, 1
      %p37 = por %p35, %p36
      %p38 = scmp.ne.s32.totalorder %s27, %s28
      %p39 = scmp.eq.s32.totalorder %s19, 0
      %p40 = por %p38, %p39
      %p41 = scmp.ne.s32.totalorder %s27, %s28
      %p42 = scmp.eq.s32.totalorder %s20, 1
      %p43 = por %p41, %p42
      %p45 = scmp.ne.s32.totalorder %s28, %s44
      %p46 = scmp.eq.s32.totalorder %s20, 0
      %p47 = por %p45, %p46
      %s49 = sadd.s32 %s48, 1
      %p52 = scmp.eq.s32.totalorder %s14, 1
      %p53 = scmp.ne.s32.totalorder %s48, %s50
      %p54 = scmp.eq.s32.totalorder %s14, 0
      %p55 = por %p53, %p54
      %p56 = scmp.ne.s32.totalorder %s48, %s50
      %p57 = scmp.eq.s32.totalorder %s19, 1
      %p58 = por %p56, %p57
      %p59 = scmp.ne.s32.totalorder %s50, %s51
      %p60 = scmp.eq.s32.totalorder %s19, 0
      %p61 = por %p59, %p60
      %p62 = scmp.ne.s32.totalorder %s50, %s51
      %p63 = scmp.eq.s32.totalorder %s20, 1
      %p64 = por %p62, %p63
      %p66 = scmp.ne.s32.totalorder %s51, %s65
      %p67 = scmp.eq.s32.totalorder %s20, 0
      %p68 = por %p66, %p67
      %s69 = ssub.s32 %s14, %s21
      %p70 = scmp.eq.s32.totalorder %s69, 0
      %s72 = sadd.s32 %s71, 1
      %s73 = scalar_select %p70, %s71, %s72
      %p76 = pneg %p70
      %p77 = scmp.eq.s32.totalorder %s14, 1
      %p78 = por %p76, %p77
      %p79 = scmp.ne.s32.totalorder %s71, %s74
      %p80 = scmp.eq.s32.totalorder %s14, 0
      %p81 = por %p79, %p80
      %p82 = scmp.ne.s32.totalorder %s71, %s74
      %p83 = scmp.eq.s32.totalorder %s19, 1
      %p84 = por %p82, %p83
      %p85 = scmp.ne.s32.totalorder %s74, %s75
      %p86 = scmp.eq.s32.totalorder %s19, 0
      %p87 = por %p85, %p86
      %p88 = scmp.ne.s32.totalorder %s74, %s75
      %p89 = scmp.eq.s32.totalorder %s20, 1
      %p90 = por %p88, %p89
      %p92 = scmp.ne.s32.totalorder %s75, %s91
      %p93 = scmp.eq.s32.totalorder %s20, 0
      %p94 = por %p92, %p93
      %p95 = scmp.le.s32.totalorder 1, %s14
      %p96 = scmp.lt.s32.totalorder %s14, 3
      %p97 = pnand %p95, %p96
      %p98 = pneg %p97
      // Predicated region
      $region9: #{tpu_custom_call.1} parent=5 // pred_check
        _
      $region10: #{tpu_custom_call.1} parent=5 // pred_check_branch
        %100 = sbr.rel (%p97) target = $region12
      $region11: #{tpu_custom_call.1} parent=5 // pred_region
        %s101 = ssub.s32 %s14, 1
        // Predicated region
        $region13: #{tpu_custom_call.1} parent=11 // pred_check
          %p102 = pneg %p61
        $region14: #{tpu_custom_call.1} parent=11 // pred_check_branch
          %104 = sbr.rel (%p102) target = $region16
        $region15: #{tpu_custom_call.1} parent=11 // pred_region
          _
        $region16: #{tpu_custom_call.1} parent=11 // pred_fallthru
          _
      $region12: #{tpu_custom_call.1} parent=5 // pred_fallthru
        _
      %p105 = scmp.lt.s32.totalorder %s14, 2
      // Predicated region
      $region17: #{tpu_custom_call.1} parent=5 // pred_check
        %p106 = pneg %p105
      $region18: #{tpu_custom_call.1} parent=5 // pred_check_branch
        %108 = sbr.rel (%p106) target = $region20
      $region19: #{tpu_custom_call.1} parent=5 // pred_region
        // Predicated region
        $region21: #{tpu_custom_call.1} parent=19 // pred_check
          %p109 = pneg %p34
        $region22: #{tpu_custom_call.1} parent=19 // pred_check_branch
          %111 = sbr.rel (%p109) target = $region24
        $region23: #{tpu_custom_call.1} parent=19 // pred_region
          %s112 = sand.u32 %s24, 1
          %s113 = scalar_lea.sflag [#allocation3], %s112
          %s114 = sand.u32 %s24, 1
          %s115 = smul.addr %s114, 32
          %s116 = scalar_lea.vmem [#allocation2], %s115
          %s118 = ssub.s32 512, 512
          %119 = vsyncadd %s113, %s118
          %s120 = smul.addr %s14, 4
          %s121 = smul.addr %s120, 128
          %s122 = scalar_lea.hbm %s0, %s121
          %s123 = sshll.u32 %s116, 4
          %s124 = int_to_ptr.vmem [resolvable:$true] %s123
          %129 = dma.hbm_to_vmem [thread:$0]  %s122, 512, %s124, %s113, 256, 256, 16
        $region24: #{tpu_custom_call.1} parent=19 // pred_fallthru
          _
      $region20: #{tpu_custom_call.1} parent=5 // pred_fallthru
        _
      %p130 = scmp.le.s32.totalorder 1, %s14
      %p131 = scmp.lt.s32.totalorder %s14, 3
      %p132 = pnand %p130, %p131
      %p133 = pneg %p132
      // Predicated region
      $region25: #{tpu_custom_call.1} parent=5 // pred_check
        _
      $region26: #{tpu_custom_call.1} parent=5 // pred_check_branch
        %135 = sbr.rel (%p132) target = $region28
      $region27: #{tpu_custom_call.1} parent=5 // pred_region
        %s136 = ssub.s32 %s14, 1
        %s137 = sand.u32 %s27, 1
        %s138 = scalar_lea.sflag [#allocation3], %s137
        %s139 = sand.u32 %s27, 1
        %s140 = smul.addr %s139, 32
        %s141 = scalar_lea.vmem [#allocation2], %s140
        // Predicated region
        $region29: #{tpu_custom_call.1} parent=27 // pred_check
          %p142 = pneg %p40
        $region30: #{tpu_custom_call.1} parent=27 // pred_check_branch
          %144 = sbr.rel (%p142) target = $region32
        $region31: #{tpu_custom_call.1} parent=27 // pred_region
          %145 = dma.done %s138, 512
        $region32: #{tpu_custom_call.1} parent=27 // pred_fallthru
          _
        %s146 = sand.u32 %s27, 1
        %s147 = scalar_lea.sflag [#allocation3], %s146
        %s148 = sand.u32 %s27, 1
        %s149 = smul.addr %s148, 32
        %s150 = scalar_lea.vmem [#allocation2], %s149
        %p151 = pneg %p40
        %p152 = pneg %p37
        %p153 = pneg %p61
        %p154 = pneg %p58
        %p155 = pneg %p87
        %p156 = pneg %p84
        %s157 = sand.u32 %s74, 1
        %s158 = scalar_lea.sflag [#allocation4], %s157
        %s159 = sand.u32 %s74, 1
        %s160 = smul.addr %s159, 32
        %s161 = scalar_lea.vmem [#allocation5], %s160
        %v162 = vld [vmem:[%s141] sm:$0xff]
        %v163 = vld [vmem:[%s141 + $0x8] sm:$0xff]
        %v164 = vld [vmem:[%s141 + $0x10] sm:$0xff]
        %v165 = vld [vmem:[%s141 + $0x18] sm:$0xff]
        %v166 = vld [vmem:[%s1] sm:$0xff]
        %v167 = vld [vmem:[%s1 + $0x8] sm:$0xff]
        %v168 = vld [vmem:[%s1 + $0x10] sm:$0xf]
        %v169 = vadd.f32 %v162, %v163
        %170 = vadd.xlane.f32.xlu0 %v169
        %v171 = vpop.xlane.xlu0 %170
        %v172 = vadd.f32 %v164, %v165
        %173 = vadd.xlane.f32.xlu0 %v172
        %v174 = vpop.xlane.xlu0 %173
        %v175 = vmul.f32 %v171, 0.00390625
        %v176 = vmul.f32 %v174, 0.00390625
        %v177 = vsub.f32 %v162, %v175
        %v178 = vsub.f32 %v163, %v175
        %v179 = vsub.f32 %v164, %v176
        %v180 = vsub.f32 %v165, %v176
        %v181 = vmul.f32 %v177, %v177
        %v182 = vmul.f32 %v178, %v178
        %v183 = vmul.f32 %v179, %v179
        %v184 = vmul.f32 %v180, %v180
        %v185 = vadd.f32 %v181, %v182
        %186 = vadd.xlane.f32.xlu0 %v185
        %v187 = vpop.xlane.xlu0 %186
        %v188 = vadd.f32 %v183, %v184
        %189 = vadd.xlane.f32.xlu0 %v188
        %v190 = vpop.xlane.xlu0 %189
        %v191 = vmul.f32 %v187, 0.00390625
        %v192 = vmul.f32 %v190, 0.00390625
        %v193 = vrsqrt.pop %v191
        %v194 = vmul.f32 %v191, %v193
        %vm195 = vcmp.eq.f32.partialorder %v191, inf
        %v196 = vsel %vm195, %v191, %v194
        %vm197 = vcmp.eq.f32.partialorder %v191, 0.0
        %v198 = vand.u32 %v191, 2147483648
        %v199 = vsel %vm197, %v198, %v196
        %v200 = vrsqrt.pop %v192
        %v201 = vmul.f32 %v192, %v200
        %vm202 = vcmp.eq.f32.partialorder %v192, inf
        %v203 = vsel %vm202, %v192, %v201
        %vm204 = vcmp.eq.f32.partialorder %v192, 0.0
        %v205 = vand.u32 %v192, 2147483648
        %v206 = vsel %vm204, %v205, %v203
        %v207 = vadd.f32 %v199, %v175
        %v208 = vadd.f32 %v206, %v176
        %v210 = vlaneseq
        %v211 = vshrl.u32 %v210, 7
        %v212 = vsub.s32 0, %v211
        %v213 = vrot.slane %v166, %v212
        %215 = vbcast.lane.b32.xlu0 %v213, 256
        %v216 = vpop.permute.xlu0 %215
        %s218 = sor.u32 256, 8
        %219 = vbcast.lane.b32.xlu0 %v213, %s218
        %v220 = vpop.permute.xlu0 %219
        %v221 = vlaneseq
        %v222 = vshrl.u32 %v221, 7
        %v223 = vsub.s32 1, %v222
        %v224 = vrot.slane %v166, %v223
        %226 = vbcast.lane.b32.xlu0 %v224, 256
        %v227 = vpop.permute.xlu0 %226
        %s229 = sor.u32 256, 8
        %230 = vbcast.lane.b32.xlu0 %v224, %s229
        %v231 = vpop.permute.xlu0 %230
        %v236 = vmul.f32 %v207, %v216
        %v237 = vmul.f32 %v208, %v220
        %v238 = vmul.f32 %v207, %v227
        %v239 = vmul.f32 %v208, %v231
        %244 = vset.pattern.permute.xlu0 0
        %245 = vperm.xlu0 %244, %v236
        %v246 = vpop.permute.xlu0 %245
        %247 = vset.pattern.permute.xlu0 0
        %248 = vperm.xlu0 %247, %v237
        %v249 = vpop.permute.xlu0 %248
        %250 = vset.pattern.permute.xlu0 0
        %251 = vperm.xlu0 %250, %v238
        %v252 = vpop.permute.xlu0 %251
        %253 = vset.pattern.permute.xlu0 0
        %254 = vperm.xlu0 %253, %v239
        %v255 = vpop.permute.xlu0 %254
        %v256 = vlaneseq
        %v257 = vand.u32 %v256, 127
        %v258 = vlaneseq
        %v259 = vshrl.u32 %v258, 7
        %v260 = vsub.s32 %v257, %v259
        %v261 = vrot.slane %v246, %v260
        %v262 = vadd.s32 %v257, 4294967288
        %v263 = vlaneseq
        %v264 = vshrl.u32 %v263, 7
        %v265 = vsub.s32 %v262, %v264
        %v266 = vrot.slane %v249, %v265
        %vm267 = vcmask 130112
        %v268 = vsel %vm267, %v266, %v261
        %v269 = vlaneseq
        %v270 = vshrl.u32 %v269, 7
        %v271 = vsub.s32 %v257, %v270
        %v272 = vrot.slane %v252, %v271
        %v273 = vlaneseq
        %v274 = vshrl.u32 %v273, 7
        %v275 = vsub.s32 %v262, %v274
        %v276 = vrot.slane %v255, %v275
        %v277 = vsel %vm267, %v276, %v272
        %vm278 = vcmask 1041409
        %v279 = vsel %vm278, %v277, %v268
        %vm281 = vcmask 123904
        %v282 = vsel %vm281, %v279, 0.0
        %283 = vadd.xlane.f32.xlu0 %v282
        %v284 = vpop.xlane.xlu0 %283
        %v286 = vlaneseq
        %v287 = vshrl.u32 %v286, 7
        %v288 = vsub.s32 2, %v287
        %v289 = vrot.slane %v168, %v288
        %291 = vbcast.lane.b32.xlu0 %v289, 256
        %v292 = vpop.permute.xlu0 %291
        %v294 = vadd.f32 %v284, %v292
        %v295 = vmax.f32 %v294, 0.0
        %v297 = vlaneseq
        %v298 = vshrl.u32 %v297, 7
        %v299 = vsub.s32 2, %v298
        %v300 = vrot.slane %v166, %v299
        %302 = vbcast.lane.b32.xlu0 %v300, 256
        %v303 = vpop.permute.xlu0 %302
        %v304 = vlaneseq
        %v305 = vshrl.u32 %v304, 7
        %v306 = vsub.s32 3, %v305
        %v307 = vrot.slane %v166, %v306
        %309 = vbcast.lane.b32.xlu0 %v307, 256
        %v310 = vpop.permute.xlu0 %309
        %v311 = vlaneseq
        %v312 = vshrl.u32 %v311, 7
        %v313 = vsub.s32 4, %v312
        %v314 = vrot.slane %v166, %v313
        %316 = vbcast.lane.b32.xlu0 %v314, 256
        %v317 = vpop.permute.xlu0 %316
        %v318 = vlaneseq
        %v319 = vshrl.u32 %v318, 7
        %v320 = vsub.s32 5, %v319
        %v321 = vrot.slane %v166, %v320
        %323 = vbcast.lane.b32.xlu0 %v321, 256
        %v324 = vpop.permute.xlu0 %323
        %v325 = vlaneseq
        %v326 = vshrl.u32 %v325, 7
        %v327 = vsub.s32 6, %v326
        %v328 = vrot.slane %v166, %v327
        %330 = vbcast.lane.b32.xlu0 %v328, 256
        %v331 = vpop.permute.xlu0 %330
        %v332 = vlaneseq
        %v333 = vshrl.u32 %v332, 7
        %v334 = vsub.s32 7, %v333
        %v335 = vrot.slane %v166, %v334
        %337 = vbcast.lane.b32.xlu0 %v335, 256
        %v338 = vpop.permute.xlu0 %337
        %v339 = vlaneseq
        %v340 = vshrl.u32 %v339, 7
        %v341 = vsub.s32 0, %v340
        %v342 = vrot.slane %v167, %v341
        %344 = vbcast.lane.b32.xlu0 %v342, 256
        %v345 = vpop.permute.xlu0 %344
        %v346 = vlaneseq
        %v347 = vshrl.u32 %v346, 7
        %v348 = vsub.s32 1, %v347
        %v349 = vrot.slane %v167, %v348
        %351 = vbcast.lane.b32.xlu0 %v349, 256
        %v352 = vpop.permute.xlu0 %351
        %v353 = vlaneseq
        %v354 = vshrl.u32 %v353, 7
        %v355 = vsub.s32 2, %v354
        %v356 = vrot.slane %v167, %v355
        %358 = vbcast.lane.b32.xlu0 %v356, 256
        %v359 = vpop.permute.xlu0 %358
        %v360 = vlaneseq
        %v361 = vshrl.u32 %v360, 7
        %v362 = vsub.s32 3, %v361
        %v363 = vrot.slane %v167, %v362
        %365 = vbcast.lane.b32.xlu0 %v363, 256
        %v366 = vpop.permute.xlu0 %365
        %v367 = vlaneseq
        %v368 = vshrl.u32 %v367, 7
        %v369 = vsub.s32 4, %v368
        %v370 = vrot.slane %v167, %v369
        %372 = vbcast.lane.b32.xlu0 %v370, 256
        %v373 = vpop.permute.xlu0 %372
        %v374 = vlaneseq
        %v375 = vshrl.u32 %v374, 7
        %v376 = vsub.s32 5, %v375
        %v377 = vrot.slane %v167, %v376
        %379 = vbcast.lane.b32.xlu0 %v377, 256
        %v380 = vpop.permute.xlu0 %379
        %v381 = vlaneseq
        %v382 = vshrl.u32 %v381, 7
        %v383 = vsub.s32 6, %v382
        %v384 = vrot.slane %v167, %v383
        %386 = vbcast.lane.b32.xlu0 %v384, 256
        %v387 = vpop.permute.xlu0 %386
        %v388 = vlaneseq
        %v389 = vshrl.u32 %v388, 7
        %v390 = vsub.s32 7, %v389
        %v391 = vrot.slane %v167, %v390
        %393 = vbcast.lane.b32.xlu0 %v391, 256
        %v394 = vpop.permute.xlu0 %393
        %v395 = vlaneseq
        %v396 = vshrl.u32 %v395, 7
        %v397 = vsub.s32 0, %v396
        %v398 = vrot.slane %v168, %v397
        %400 = vbcast.lane.b32.xlu0 %v398, 256
        %v401 = vpop.permute.xlu0 %400
        %v402 = vlaneseq
        %v403 = vshrl.u32 %v402, 7
        %v404 = vsub.s32 1, %v403
        %v405 = vrot.slane %v168, %v404
        %407 = vbcast.lane.b32.xlu0 %v405, 256
        %v408 = vpop.permute.xlu0 %407
        %v425 = vmul.f32 %v295, %v303
        %v426 = vmul.f32 %v295, %v310
        %v427 = vmul.f32 %v295, %v317
        %v428 = vmul.f32 %v295, %v324
        %v429 = vmul.f32 %v295, %v331
        %v430 = vmul.f32 %v295, %v338
        %v431 = vmul.f32 %v295, %v345
        %v432 = vmul.f32 %v295, %v352
        %v433 = vmul.f32 %v295, %v359
        %v434 = vmul.f32 %v295, %v366
        %v435 = vmul.f32 %v295, %v373
        %v436 = vmul.f32 %v295, %v380
        %v437 = vmul.f32 %v295, %v387
        %v438 = vmul.f32 %v295, %v394
        %v439 = vmul.f32 %v295, %v401
        %v440 = vmul.f32 %v295, %v408
        %457 = vset.pattern.permute.xlu0 0
        %458 = vperm.xlu0 %457, %v425
        %v459 = vpop.permute.xlu0 %458
        %460 = vset.pattern.permute.xlu0 0
        %461 = vperm.xlu0 %460, %v426
        %v462 = vpop.permute.xlu0 %461
        %463 = vset.pattern.permute.xlu0 0
        %464 = vperm.xlu0 %463, %v427
        %v465 = vpop.permute.xlu0 %464
        %466 = vset.pattern.permute.xlu0 0
        %467 = vperm.xlu0 %466, %v428
        %v468 = vpop.permute.xlu0 %467
        %469 = vset.pattern.permute.xlu0 0
        %470 = vperm.xlu0 %469, %v429
        %v471 = vpop.permute.xlu0 %470
        %472 = vset.pattern.permute.xlu0 0
        %473 = vperm.xlu0 %472, %v430
        %v474 = vpop.permute.xlu0 %473
        %475 = vset.pattern.permute.xlu0 0
        %476 = vperm.xlu0 %475, %v431
        %v477 = vpop.permute.xlu0 %476
        %478 = vset.pattern.permute.xlu0 0
        %479 = vperm.xlu0 %478, %v432
        %v480 = vpop.permute.xlu0 %479
        %481 = vset.pattern.permute.xlu0 0
        %482 = vperm.xlu0 %481, %v433
        %v483 = vpop.permute.xlu0 %482
        %484 = vset.pattern.permute.xlu0 0
        %485 = vperm.xlu0 %484, %v434
        %v486 = vpop.permute.xlu0 %485
        %487 = vset.pattern.permute.xlu0 0
        %488 = vperm.xlu0 %487, %v435
        %v489 = vpop.permute.xlu0 %488
        %490 = vset.pattern.permute.xlu0 0
        %491 = vperm.xlu0 %490, %v436
        %v492 = vpop.permute.xlu0 %491
        %493 = vset.pattern.permute.xlu0 0
        %494 = vperm.xlu0 %493, %v437
        %v495 = vpop.permute.xlu0 %494
        %496 = vset.pattern.permute.xlu0 0
        %497 = vperm.xlu0 %496, %v438
        %v498 = vpop.permute.xlu0 %497
        %499 = vset.pattern.permute.xlu0 0
        %500 = vperm.xlu0 %499, %v439
        %v501 = vpop.permute.xlu0 %500
        %502 = vset.pattern.permute.xlu0 0
        %503 = vperm.xlu0 %502, %v440
        %v504 = vpop.permute.xlu0 %503
        %v505 = vlaneseq
        %v506 = vshrl.u32 %v505, 7
        %v507 = vsub.s32 %v257, %v506
        %v508 = vrot.slane %v459, %v507
        %v509 = vlaneseq
        %v510 = vshrl.u32 %v509, 7
        %v511 = vsub.s32 %v257, %v510
        %v512 = vrot.slane %v462, %v511
        %v513 = vlaneseq
        %v514 = vshrl.u32 %v513, 7
        %v515 = vsub.s32 %v257, %v514
        %v516 = vrot.slane %v465, %v515
        %v517 = vlaneseq
        %v518 = vshrl.u32 %v517, 7
        %v519 = vsub.s32 %v257, %v518
        %v520 = vrot.slane %v468, %v519
        %v521 = vlaneseq
        %v522 = vshrl.u32 %v521, 7
        %v523 = vsub.s32 %v257, %v522
        %v524 = vrot.slane %v471, %v523
        %v525 = vlaneseq
        %v526 = vshrl.u32 %v525, 7
        %v527 = vsub.s32 %v257, %v526
        %v528 = vrot.slane %v474, %v527
        %v529 = vlaneseq
        %v530 = vshrl.u32 %v529, 7
        %v531 = vsub.s32 %v257, %v530
        %v532 = vrot.slane %v477, %v531
        %v533 = vlaneseq
        %v534 = vshrl.u32 %v533, 7
        %v535 = vsub.s32 %v257, %v534
        %v536 = vrot.slane %v480, %v535
        %v537 = vlaneseq
        %v538 = vshrl.u32 %v537, 7
        %v539 = vsub.s32 %v257, %v538
        %v540 = vrot.slane %v483, %v539
        %v541 = vlaneseq
        %v542 = vshrl.u32 %v541, 7
        %v543 = vsub.s32 %v257, %v542
        %v544 = vrot.slane %v486, %v543
        %v545 = vlaneseq
        %v546 = vshrl.u32 %v545, 7
        %v547 = vsub.s32 %v257, %v546
        %v548 = vrot.slane %v489, %v547
        %v549 = vlaneseq
        %v550 = vshrl.u32 %v549, 7
        %v551 = vsub.s32 %v257, %v550
        %v552 = vrot.slane %v492, %v551
        %v553 = vlaneseq
        %v554 = vshrl.u32 %v553, 7
        %v555 = vsub.s32 %v257, %v554
        %v556 = vrot.slane %v495, %v555
        %v557 = vlaneseq
        %v558 = vshrl.u32 %v557, 7
        %v559 = vsub.s32 %v257, %v558
        %v560 = vrot.slane %v498, %v559
        %v561 = vlaneseq
        %v562 = vshrl.u32 %v561, 7
        %v563 = vsub.s32 %v257, %v562
        %v564 = vrot.slane %v501, %v563
        %v565 = vlaneseq
        %v566 = vshrl.u32 %v565, 7
        %v567 = vsub.s32 %v257, %v566
        %v568 = vrot.slane %v504, %v567
        %v569 = vsel %vm278, %v512, %v508
        %vm570 = vcmask 1042434
        %v571 = vsel %vm570, %v516, %v569
        %vm572 = vcmask 1043459
        %v573 = vsel %vm572, %v520, %v571
        %vm574 = vcmask 1044484
        %v575 = vsel %vm574, %v524, %v573
        %vm576 = vcmask 1045509
        %v577 = vsel %vm576, %v528, %v575
        %vm578 = vcmask 1046534
        %v579 = vsel %vm578, %v532, %v577
        %vm580 = vcmask 1047559
        %v581 = vsel %vm580, %v536, %v579
        %v582 = vsel %vm278, %v544, %v540
        %v583 = vsel %vm570, %v548, %v582
        %v584 = vsel %vm572, %v552, %v583
        %v585 = vsel %vm574, %v556, %v584
        %v586 = vsel %vm576, %v560, %v585
        %v587 = vsel %vm578, %v564, %v586
        %v588 = vsel %vm580, %v568, %v587
        %vm591 = vcmask 15360
        %v592 = vsel %vm591, %v581, 0.0
        %593 = vadd.xlane.f32.xlu0 %v592
        %v594 = vpop.xlane.xlu0 %593
        %v595 = vsel %vm591, %v588, 0.0
        %596 = vadd.xlane.f32.xlu0 %v595
        %v597 = vpop.xlane.xlu0 %596
        %v598 = vlaneseq
        %v599 = vshrl.u32 %v598, 7
        %v600 = vsub.s32 3, %v599
        %v601 = vrot.slane %v168, %v600
        %603 = vbcast.lane.b32.xlu0 %v601, 256
        %v604 = vpop.permute.xlu0 %603
        %s606 = sor.u32 256, 8
        %607 = vbcast.lane.b32.xlu0 %v601, %s606
        %v608 = vpop.permute.xlu0 %607
        %v611 = vadd.f32 %v594, %v604
        %v612 = vadd.f32 %v597, %v608
        %v613 = vxor.u32 %v611, 2147483648
        %v614 = vxor.u32 %v612, 2147483648
        %v615 = vmul.f32 %v613, 1.442695
        %v616 = vpow.pop %v615
        %v617 = vmul.f32 %v614, 1.442695
        %v618 = vpow.pop %v617
        %v619 = vadd.f32 %v616, 1.0
        %v620 = vadd.f32 %v618, 1.0
        %v621 = vrcp.pop %v619
        %v622 = vmul.f32 1.0, %v621
        %v623 = vrcp.pop %v620
        %v624 = vmul.f32 1.0, %v623
        %626 = vset.pattern.permute.xlu0 0
        %627 = vperm.xlu0 %626, %v622
        %v628 = vpop.permute.xlu0 %627
        %631 = vset.pattern.permute.xlu0 0
        %632 = vperm.xlu0 %631, %v624
        %v633 = vpop.permute.xlu0 %632
        %v635 = vmul.f32 %v162, %v628
        %v636 = vmul.f32 %v163, %v628
        %v637 = vmul.f32 %v164, %v633
        %v638 = vmul.f32 %v165, %v633
        %639 = vst [vmem:[%s161] sm:$0xff] %v635
        %640 = vst [vmem:[%s161 + $0x8] sm:$0xff] %v636
        %641 = vst [vmem:[%s161 + $0x10] sm:$0xff] %v637
        %642 = vst [vmem:[%s161 + $0x18] sm:$0xff] %v638
        %s643 = sand.u32 %s74, 1
        %s644 = scalar_lea.sflag [#allocation4], %s643
        %s645 = sand.u32 %s74, 1
        %s646 = smul.addr %s645, 32
        %s647 = scalar_lea.vmem [#allocation5], %s646
        // Predicated region
        $region33: #{tpu_custom_call.1} parent=27 // pred_check
          %p648 = pneg %p84
        $region34: #{tpu_custom_call.1} parent=27 // pred_check_branch
          %650 = sbr.rel (%p648) target = $region36
        $region35: #{tpu_custom_call.1} parent=27 // pred_region
          %s652 = ssub.s32 512, 512
          %653 = vsyncadd %s644, %s652
          %s654 = smul.addr %s19, 4
          %s655 = smul.addr %s654, 128
          %s656 = scalar_lea.hbm %s2, %s655
          %s657 = sshll.u32 %s647, 4
          %s658 = int_to_ptr.vmem [resolvable:$true] %s657
          %663 = dma.vmem_to_hbm [thread:$0]  %s658, 512, %s656, %s644, 256, 256, 16
        $region36: #{tpu_custom_call.1} parent=27 // pred_fallthru
          _
      $region28: #{tpu_custom_call.1} parent=5 // pred_fallthru
        _
      %p664 = scmp.le.s32.totalorder 2, %s14
      // Predicated region
      $region37: #{tpu_custom_call.1} parent=5 // pred_check
        %p665 = pneg %p664
      $region38: #{tpu_custom_call.1} parent=5 // pred_check_branch
        %667 = sbr.rel (%p665) target = $region40
      $region39: #{tpu_custom_call.1} parent=5 // pred_region
        %s668 = ssub.s32 %s14, 2
        // Predicated region
        $region41: #{tpu_custom_call.1} parent=39 // pred_check
          %p669 = pneg %p90
        $region42: #{tpu_custom_call.1} parent=39 // pred_check_branch
          %671 = sbr.rel (%p669) target = $region44
        $region43: #{tpu_custom_call.1} parent=39 // pred_region
          %s672 = sand.u32 %s75, 1
          %s673 = scalar_lea.sflag [#allocation4], %s672
          %s674 = sand.u32 %s75, 1
          %s675 = smul.addr %s674, 32
          %s676 = scalar_lea.vmem [#allocation5], %s675
          %677 = dma.done %s673, 512
        $region44: #{tpu_custom_call.1} parent=39 // pred_fallthru
          _
      $region40: #{tpu_custom_call.1} parent=5 // pred_fallthru
        _
    $region6: #{tpu_custom_call.1} parent=1 // loop_footer
      %s18 = sadd.s32 1, %s14
    $region7: #{tpu_custom_call.1} parent=1 // loop_footer_branch
      %13 = sbr.rel target = $region3
    $region8: #{tpu_custom_call.1} parent=1 // loop_exit
      _
    %678 = vsyncpa [#allocation3], 1
    %s679 = scalar_lea.sflag [#allocation3], 1
    %680 = vsyncpa %s679, 1
    %681 = vsyncpa [#allocation4], 1
    %s682 = scalar_lea.sflag [#allocation4], 1
    %683 = vsyncpa %s682, 1

</llo_original>
